<compile_context>
chip_gen: v7x
topology: tpu7x:2x2x1
jax: 0.10.0
libtpu: 0.0.40
codegen_flags: <defaults>
</compile_context>

<pallas_src>
import jax
import jax.numpy as jnp
from jax.experimental import pallas as pl
from jax.experimental.pallas import tpu as pltpu


def _rope_kernel_half(inv_freq_ref, out_ref):
    """Half-width trig + lane-aligned duplicate stores.

    inv_freq_ref : (1, half) f32 VMEM (same block every grid step)
    out_ref      : (2, TS, dim) VMEM output block; [0]=cos, [1]=sin
    Requires half % 128 == 0 (both half-slices are lane-aligned).
    """
    ts = out_ref.shape[1]
    dim = out_ref.shape[2]
    half = dim // 2

    # Global positions for this tile (int math, then one cast).
    pos = (jax.lax.broadcasted_iota(jnp.int32, (ts, half), 0)
           + pl.program_id(0) * ts).astype(jnp.float32)
    freqs = pos * inv_freq_ref[...]               # (TS, half), broadcast rows

    c = jnp.cos(freqs).astype(out_ref.dtype)
    s = jnp.sin(freqs).astype(out_ref.dtype)

    # enc = concat([freqs, freqs]) -> duplicate via two direct stores.
    out_ref[0, :, :half] = c
    out_ref[0, :, half:] = c
    out_ref[1, :, :half] = s
    out_ref[1, :, half:] = s


def _rope_kernel_full(inv_freq_full_ref, out_ref):
    """Full-width trig, single store per table (used when half is not a
    multiple of 128, e.g. small head dims where half-width saves nothing).

    inv_freq_full_ref : (1, dim) f32 VMEM, already [inv_freq, inv_freq]
    out_ref           : (2, TS, dim) VMEM output block; [0]=cos, [1]=sin
    """
    ts = out_ref.shape[1]
    dim = out_ref.shape[2]

    pos = (jax.lax.broadcasted_iota(jnp.int32, (ts, dim), 0)
           + pl.program_id(0) * ts).astype(jnp.float32)
    freqs = pos * inv_freq_full_ref[...]          # (TS, dim)

    out_ref[0] = jnp.cos(freqs).astype(out_ref.dtype)
    out_ref[1] = jnp.sin(freqs).astype(out_ref.dtype)


def rotary_positional_encoding(hidden_states, hidden_size, base: int = 10000):
    """JAX/Pallas equivalent of RotaryPositionalEncoding.forward.

    Only hidden_states.shape[1] (sequence length) and dtype are used, matching
    the PyTorch module.  Returns (2, seq, 1, 1, hidden_size) in that dtype.
    """
    seq = int(hidden_states.shape[1])
    dim = int(hidden_size)
    assert dim % 2 == 0, "hidden_size must be even for rotary positional encoding"
    half = dim // 2
    out_dtype = hidden_states.dtype
    out_bytes = jnp.dtype(out_dtype).itemsize

    # Same buffer formula as the module __init__.
    inv_freq = 1.0 / (base ** (jnp.arange(0, dim, 2, dtype=jnp.float32) / dim))

    use_half = (half % 128 == 0)
    if use_half:
        freq_in = inv_freq.reshape(1, half)
        kernel = _rope_kernel_half
        in_block = (1, half)
    else:
        # Duplicate in the wrapper; kernel does full-width trig + dense store.
        freq_in = jnp.concatenate([inv_freq, inv_freq]).reshape(1, dim)
        kernel = _rope_kernel_full
        in_block = (1, dim)

    # ---- dim-aware sequence tile ------------------------------------------
    # Per-row VMEM: double-buffered output block (2 bufs x 2 tables x dim) in
    # out_dtype plus ~3 f32-width temporaries (pos/freqs/cos/sin).
    budget_bytes = 24 * 1024 * 1024
    per_row_bytes = 4 * dim * out_bytes + 12 * dim
    ts_cap = max(8, (budget_bytes // per_row_bytes) // 8 * 8)

    ts = min(seq, 1024, ts_cap)
    if ts == seq and seq >= 512:
        # Ensure >= 2 grid steps so both v7x TensorCores get work
        # (dimension_semantics=("parallel",)); harmless on 1-TC chips.
        ts = ((seq + 1) // 2 + 7) // 8 * 8
        ts = min(ts, ts_cap)

    grid = (pl.cdiv(seq, ts),)

    fused = pl.pallas_call(
        kernel,
        out_shape=jax.ShapeDtypeStruct((2, seq, dim), out_dtype),
        grid_spec=pl.GridSpec(
            grid=grid,
            in_specs=[pl.BlockSpec(in_block, lambda i: (0, 0))],
            out_specs=pl.BlockSpec((2, ts, dim), lambda i: (0, i, 0)),
        ),
        compiler_params=pltpu.CompilerParams(
            dimension_semantics=("parallel",),
            vmem_limit_bytes=48 * 1024 * 1024,
        ),
    )(freq_in)

    # Metadata-only reshape to match torch's stack([cos[:,None,None,:], ...]).
    return fused.reshape(2, seq, 1, 1, dim)


def _reference(hidden_states, hidden_size, base=10000):
    """Pure-JAX reference mirroring the PyTorch forward."""
    seq = hidden_states.shape[1]
    dim = hidden_size
    inv_freq = 1.0 / (base ** (jnp.arange(0, dim, 2, dtype=jnp.float32) / dim))
    t = jnp.arange(seq, dtype=jnp.float32)
    freqs = jnp.einsum("i,j->ij", t, inv_freq)
    enc = jnp.concatenate([freqs, freqs], axis=-1)
    cos_enc = jnp.cos(enc)[:, None, None, :]
    sin_enc = jnp.sin(enc)[:, None, None, :]
    return jnp.stack([cos_enc, sin_enc]).astype(hidden_states.dtype)


if __name__ == "__main__":
    key = jax.random.PRNGKey(0)

    # Primary (small) case from the module spec: batch=2, seq=8, hidden=32.
    # half=16 < 128 -> exercises the full-width-trig / single-store path.
    batch, seq, hidden = 2, 8, 32
    hidden_states = jax.random.normal(key, (batch, seq, hidden), dtype=jnp.float32)
    out = rotary_positional_encoding(hidden_states, hidden_size=hidden)
    out = jax.block_until_ready(out)
    ref = _reference(hidden_states, hidden_size=hidden)
    assert out.shape == (2, seq, 1, 1, hidden), out.shape
    assert out.dtype == hidden_states.dtype
    assert jnp.allclose(out, ref, atol=1e-5, rtol=1e-5)

    # Secondary check: half=128 -> lane-aligned half-slice store path, and
    # seq=512 -> tiled grid of 2 steps (validates program_id position offset).
    seq2, hidden2 = 512, 256
    hs2 = jnp.zeros((1, seq2, hidden2), dtype=jnp.float32)
    out2 = jax.block_until_ready(
        rotary_positional_encoding(hs2, hidden_size=hidden2))
    ref2 = _reference(hs2, hidden_size=hidden2)
    assert out2.shape == (2, seq2, 1, 1, hidden2), out2.shape
    assert jnp.allclose(out2, ref2, atol=1e-5, rtol=1e-5)

    print("KERNEL_OK")
</pallas_src>

<mosaic_0001>
module attributes {stable_mosaic.version = 11 : i64} {
  func.func @_rope_kernel_full(%arg0: i32, %arg1: memref<1x32xf32, #tpu.memory_space<vmem>>, %arg2: memref<2x8x32xf32, #tpu.memory_space<vmem>>) attributes {dimension_semantics = [#tpu.dimension_semantics<parallel>], iteration_bounds = array<i64: 1>, scalar_prefetch = 0 : i64, scratch_operands = 0 : i64, tpu.core_type = #tpu.core_type<tc>, window_params = [{pipeline_mode = #tpu.pipeline_mode<synchronous>, transform_indices = @transform_0, window_bounds = array<i64: 1, 32>}, {transform_indices = @transform_1, window_bounds = array<i64: 2, 8, 32>}]} {
    %0 = tpu.iota {dimensions = array<i32: 0>} : vector<8x32xi32>
    %c8_i32 = arith.constant 8 : i32
    %1 = arith.muli %arg0, %c8_i32 : i32
    %2 = vector.broadcast %1 : i32 to vector<8x32xi32>
    %3 = arith.addi %0, %2 : vector<8x32xi32>
    %4 = arith.sitofp %3 : vector<8x32xi32> to vector<8x32xf32>
    %c0 = arith.constant 0 : index
    %c0_0 = arith.constant 0 : index
    %5 = vector.load %arg1[%c0, %c0_0] : memref<1x32xf32, #tpu.memory_space<vmem>>, vector<1x32xf32>
    %6 = vector.broadcast %5 : vector<1x32xf32> to vector<8x32xf32>
    %7 = arith.mulf %4, %6 : vector<8x32xf32>
    %8 = math.cos %7 : vector<8x32xf32>
    %c0_1 = arith.constant 0 : index
    %c0_2 = arith.constant 0 : index
    %c0_3 = arith.constant 0 : index
    %9 = vector.load %arg2[%c0_1, %c0_2, %c0_3] : memref<2x8x32xf32, #tpu.memory_space<vmem>>, vector<1x8x32xf32>
    %10 = vector.shape_cast %9 : vector<1x8x32xf32> to vector<8x32xf32>
    %11 = vector.shape_cast %8 : vector<8x32xf32> to vector<1x8x32xf32>
    tpu.vector_store %arg2[%c0_1, %c0_2, %c0_3], %11 {strides = array<i32>} : memref<2x8x32xf32, #tpu.memory_space<vmem>>, vector<1x8x32xf32>,
    %12 = math.sin %7 : vector<8x32xf32>
    %c1 = arith.constant 1 : index
    %c0_4 = arith.constant 0 : index
    %c0_5 = arith.constant 0 : index
    %13 = vector.load %arg2[%c1, %c0_4, %c0_5] : memref<2x8x32xf32, #tpu.memory_space<vmem>>, vector<1x8x32xf32>
    %14 = vector.shape_cast %13 : vector<1x8x32xf32> to vector<8x32xf32>
    %15 = vector.shape_cast %12 : vector<8x32xf32> to vector<1x8x32xf32>
    tpu.vector_store %arg2[%c1, %c0_4, %c0_5], %15 {strides = array<i32>} : memref<2x8x32xf32, #tpu.memory_space<vmem>>, vector<1x8x32xf32>,
    return
  }
  func.func @transform_0(%arg0: i32) -> (i32, i32) {
    %c0_i32 = arith.constant 0 : i32
    %c0_i32_0 = arith.constant 0 : i32
    %c0_i32_1 = arith.constant 0 : i32
    return %c0_i32, %c0_i32_0 : i32, i32
  }
  func.func @transform_1(%arg0: i32) -> (i32, i32, i32) {
    %c0_i32 = arith.constant 0 : i32
    %c0_i32_0 = arith.constant 0 : i32
    %c0_i32_1 = arith.constant 0 : i32
    return %c0_i32, %arg0, %c0_i32_0 : i32, i32, i32
  }
}

</mosaic_0001>

<llo_original>
// kernel: tpu_custom_call.1
$region0: #{tpu_custom_call.1}
  #allocation0 [shape = 'u32[]', space=smem, size = 0x4, offset = 0x4, fixed_abs, tag = 'smem constant byte address 0x4 - core index']
  #allocation1 [shape = 'u32[144,128]{1,0:T(1,128)}', space=vmem, size = 0x12000, scoped, tag = 'internal scratch']
  %s0 = inlined_call_operand.hbm [shape: f32[1,32], index: 0, kind: input, shape index: {}]
  %s1 = inlined_call_operand.hbm [shape: f32[2,8,32], index: 1, kind: output, shape index: {}]
  %s2 = sld [smem:[#allocation0]]
  $region18: #{tpu_custom_call.1} parent=0
    _
  %s4 = ssub.s32 1, %s2
  %s5 = scalar_select 0, %s4, %s2
  $region1: #{tpu_custom_call.1} parent=0
    #allocation2 [shape = 'u8[512]{0}', space=vmem, size = 0x400, scoped, tag = 'input window, operand 0, single buffered']
    #allocation3 [shape = 's32[1]{0}', space=sflag, size = 0x4, scoped, tag = 'scoped memory for tpu_custom_call.1']
    #allocation4 [shape = 's32[1]{0}', space=sflag, size = 0x4, scoped, tag = 'scoped memory for tpu_custom_call.1']
    #allocation5 [shape = 'u8[8192]{0}', space=vmem, size = 0x2000, scoped, tag = 'output window, operand 0, single buffered']
    %6 = vsyncpa [#allocation3], 0
    %7 = vsyncpa [#allocation4], 0
    // Predicated region
    $region2: #{tpu_custom_call.1} parent=1 // pred_check
      _
    $region3: #{tpu_custom_call.1} parent=1 // pred_check_branch
      %9 = sbr.rel (0) target = $region5
    $region4: #{tpu_custom_call.1} parent=1 // pred_region
      %s11 = ssub.s32 16, 16
      %12 = vsyncadd [#allocation3], %s11
      %s14 = sshll.u32 [#allocation2], 4
      %s15 = int_to_ptr.vmem [resolvable:$true] %s14
      %17 = dma.hbm_to_vmem [thread:$0]  %s0, 16, %s15, [#allocation3]
    $region5: #{tpu_custom_call.1} parent=1 // pred_fallthru
      _
    // Predicated region
    $region6: #{tpu_custom_call.1} parent=1 // pred_check
      _
    $region7: #{tpu_custom_call.1} parent=1 // pred_check_branch
      %19 = sbr.rel (0) target = $region9
    $region8: #{tpu_custom_call.1} parent=1 // pred_region
      %20 = dma.done [#allocation3], 16
    $region9: #{tpu_custom_call.1} parent=1 // pred_fallthru
      _
    %v21 = vlaneseq
    %v22 = vshrl.u32 %v21, 7
    %s23 = smul.u32 0, 8
    %v24 = vstv %s23
    %v25 = vadd.s32 %v22, %v24
    %v26 = vcvt.s32.f32 %v25
    %v27 = vld [vmem:[#allocation2] sm:$0x1]
    %v29 = vlaneseq
    %v30 = vshrl.u32 %v29, 7
    %v31 = vsub.s32 0, %v30
    %v32 = vrot.slane %v27, %v31
    %v34 = vmul.f32 %v26, %v32
    %v35 = vand.u32 2147483647, %v34
    %vm36 = vcmp.le.f32.partialorder %v35, 0.7853982
    %vm37 = vcmp.lt.s32.totalorder %v34, 0
    %v38 = vand.u32 %v34, 2139095040
    %v39 = vshrl.u32 %v38, 23
    %v40 = vsub.s32 %v39, 127
    %v41 = vand.u32 2147483647, %v34
    %v42 = vand.u32 %v41, 8388607
    %v43 = vor.u32 %v42, 8388608
    %v44 = vsub.s32 0, %v43
    %v45 = vadd.s32 %v40, 1
    %vm46 = vcmp.gt.s32.totalorder %v45, 0
    %v47 = vsel %vm46, %v45, 0
    %v48 = vshrl.u32 %v47, 5
    %v49 = vand.u32 %v47, 31
    %v50 = vsub.s32 32, %v49
    %v51 = vshrl.u32 683565275, %v50
    %v52 = vshll.u32 683565275, %v49
    %v53 = vshrl.u32 2475754826, %v50
    %v54 = vor.u32 %v52, %v53
    %v55 = vshll.u32 2475754826, %v49
    %v56 = vshrl.u32 2131351028, %v50
    %v57 = vor.u32 %v55, %v56
    %v58 = vshll.u32 2131351028, %v49
    %v59 = vshrl.u32 2102212464, %v50
    %v60 = vor.u32 %v58, %v59
    %v61 = vshll.u32 2102212464, %v49
    %v62 = vshrl.u32 920167782, %v50
    %v63 = vor.u32 %v61, %v62
    %v64 = vshll.u32 920167782, %v49
    %v65 = vshrl.u32 1326507024, %v50
    %v66 = vor.u32 %v64, %v65
    %vm67 = vcmp.lt.s32.totalorder %v48, 1
    %vm68 = vcmp.lt.s32.totalorder %v48, 2
    %vm69 = vcmp.lt.s32.totalorder %v48, 3
    %vm70 = vcmp.lt.s32.totalorder %v48, 4
    %v71 = vsel %vm67, %v51, %v54
    %v72 = vsel %vm70, %v60, 2102212464
    %v73 = vsel %vm69, %v57, %v72
    %v74 = vsel %vm68, %v71, %v73
    %v75 = vsel %vm67, %v54, %v57
    %v76 = vsel %vm70, %v63, 920167782
    %v77 = vsel %vm69, %v60, %v76
    %v78 = vsel %vm68, %v75, %v77
    %v79 = vsel %vm67, %v57, %v60
    %v80 = vsel %vm70, %v66, 1326507024
    %v81 = vsel %vm69, %v63, %v80
    %v82 = vsel %vm68, %v79, %v81
    %v83 = vshll.u32 %v43, 8
    %v84 = vmul.u32.u64.compose %v83, %v82
    %v85 = vextract.low.u32 %v84
    %v86 = vextract.high.u32 %v84
    %v87 = vmul.u32.u64.compose %v83, %v78
    %v88 = vextract.low.u32 %v87
    %v89 = vextract.high.u32 %v87
    %v90 = vmul.u32 %v83, %v74
    %v91 = vadd.s32 %v86, %v88
    %vm92 = vc.u32 %v86, %v88
    %v93 = vadd.s32 %v89, 1
    %v94 = vsel %vm92, %v93, %v89
    %v95 = vadd.s32 %v90, %v94
    %v96 = vadd.s32 %v95, 536870912
    %v97 = vshrl.u32 %v96, 30
    %v98 = vshll.u32 %v97, 30
    %v99 = vsub.s32 %v95, %v98
    %vm100 = vcmp.lt.s32.totalorder %v99, 0
    %v101 = vsub.s32 0, %v99
    %v102 = vsel %vm100, %v101, %v99
    %v103 = vclz %v102
    %v104 = vsub.s32 %v103, 2
    %vm105 = vcmp.gt.s32.totalorder 0, %v104
    %v106 = vsel %vm105, 0, %v104
    %v107 = vsub.s32 32, %v106
    %v108 = vshll.u32 %v99, %v106
    %v109 = vshrl.u32 %v91, %v107
    %v110 = vor.u32 %v108, %v109
    %v111 = vsub.s32 4294967266, %v106
    %v112 = vadd.s32 %v111, 127
    %v113 = vshll.u32 %v112, 23
    %v114 = vor.u32 4788187, %v113
    %v115 = vand.u32 2147483647, %v114
    %v117 = vcvt.s32.f32 %v110
    %v118 = vmul.f32 %v117, %v115
    %v119 = vxor.u32 %v118, 2147483648
    %v120 = vsel %vm37, %v119, %v118
    %v121 = vsub.s32 4, %v97
    %v122 = vsel %vm37, %v121, %v97
    %v123 = vsel %vm36, %v34, %v120
    %v124 = vsel %vm36, 0, %v122
    %v125 = vcosq.f32.pop %v123
    %v126 = vsinq.f32.pop %v123
    %vm127 = vweird.f32 %v34
    %v128 = vand.u32 %v124, 3
    %vm129 = vcmp.lt.s32.totalorder %v128, 2
    %vm130 = vcmp.eq.s32.totalorder %v128, 0
    %v131 = vxor.u32 %v126, 2147483648
    %v132 = vsel %vm130, %v125, %v131
    %vm133 = vcmp.eq.s32.totalorder %v128, 2
    %v134 = vxor.u32 %v125, 2147483648
    %v135 = vsel %vm133, %v134, %v126
    %v136 = vsel %vm129, %v132, %v135
    %v137 = vsel %vm127, nan, %v136
    %vm138 = vcmask 261120
    %139 = vst.msk [vmem:[#allocation5] sm:$0xff] %vm138, %v137
    %v140 = vand.u32 2147483647, %v34
    %vm141 = vcmp.le.f32.partialorder %v140, 0.7853982
    %vm142 = vcmp.lt.s32.totalorder %v34, 0
    %v143 = vand.u32 %v34, 2139095040
    %v144 = vshrl.u32 %v143, 23
    %v145 = vsub.s32 %v144, 127
    %v146 = vand.u32 2147483647, %v34
    %v147 = vand.u32 %v146, 8388607
    %v148 = vor.u32 %v147, 8388608
    %v149 = vsub.s32 0, %v148
    %v150 = vadd.s32 %v145, 1
    %vm151 = vcmp.gt.s32.totalorder %v150, 0
    %v152 = vsel %vm151, %v150, 0
    %v153 = vshrl.u32 %v152, 5
    %v154 = vand.u32 %v152, 31
    %v155 = vsub.s32 32, %v154
    %v156 = vshrl.u32 683565275, %v155
    %v157 = vshll.u32 683565275, %v154
    %v158 = vshrl.u32 2475754826, %v155
    %v159 = vor.u32 %v157, %v158
    %v160 = vshll.u32 2475754826, %v154
    %v161 = vshrl.u32 2131351028, %v155
    %v162 = vor.u32 %v160, %v161
    %v163 = vshll.u32 2131351028, %v154
    %v164 = vshrl.u32 2102212464, %v155
    %v165 = vor.u32 %v163, %v164
    %v166 = vshll.u32 2102212464, %v154
    %v167 = vshrl.u32 920167782, %v155
    %v168 = vor.u32 %v166, %v167
    %v169 = vshll.u32 920167782, %v154
    %v170 = vshrl.u32 1326507024, %v155
    %v171 = vor.u32 %v169, %v170
    %vm172 = vcmp.lt.s32.totalorder %v153, 1
    %vm173 = vcmp.lt.s32.totalorder %v153, 2
    %vm174 = vcmp.lt.s32.totalorder %v153, 3
    %vm175 = vcmp.lt.s32.totalorder %v153, 4
    %v176 = vsel %vm172, %v156, %v159
    %v177 = vsel %vm175, %v165, 2102212464
    %v178 = vsel %vm174, %v162, %v177
    %v179 = vsel %vm173, %v176, %v178
    %v180 = vsel %vm172, %v159, %v162
    %v181 = vsel %vm175, %v168, 920167782
    %v182 = vsel %vm174, %v165, %v181
    %v183 = vsel %vm173, %v180, %v182
    %v184 = vsel %vm172, %v162, %v165
    %v185 = vsel %vm175, %v171, 1326507024
    %v186 = vsel %vm174, %v168, %v185
    %v187 = vsel %vm173, %v184, %v186
    %v188 = vshll.u32 %v148, 8
    %v189 = vmul.u32.u64.compose %v188, %v187
    %v190 = vextract.low.u32 %v189
    %v191 = vextract.high.u32 %v189
    %v192 = vmul.u32.u64.compose %v188, %v183
    %v193 = vextract.low.u32 %v192
    %v194 = vextract.high.u32 %v192
    %v195 = vmul.u32 %v188, %v179
    %v196 = vadd.s32 %v191, %v193
    %vm197 = vc.u32 %v191, %v193
    %v198 = vadd.s32 %v194, 1
    %v199 = vsel %vm197, %v198, %v194
    %v200 = vadd.s32 %v195, %v199
    %v201 = vadd.s32 %v200, 536870912
    %v202 = vshrl.u32 %v201, 30
    %v203 = vshll.u32 %v202, 30
    %v204 = vsub.s32 %v200, %v203
    %vm205 = vcmp.lt.s32.totalorder %v204, 0
    %v206 = vsub.s32 0, %v204
    %v207 = vsel %vm205, %v206, %v204
    %v208 = vclz %v207
    %v209 = vsub.s32 %v208, 2
    %vm210 = vcmp.gt.s32.totalorder 0, %v209
    %v211 = vsel %vm210, 0, %v209
    %v212 = vsub.s32 32, %v211
    %v213 = vshll.u32 %v204, %v211
    %v214 = vshrl.u32 %v196, %v212
    %v215 = vor.u32 %v213, %v214
    %v216 = vsub.s32 4294967266, %v211
    %v217 = vadd.s32 %v216, 127
    %v218 = vshll.u32 %v217, 23
    %v219 = vor.u32 4788187, %v218
    %v220 = vand.u32 2147483647, %v219
    %v222 = vcvt.s32.f32 %v215
    %v223 = vmul.f32 %v222, %v220
    %v224 = vxor.u32 %v223, 2147483648
    %v225 = vsel %vm142, %v224, %v223
    %v226 = vsub.s32 4, %v202
    %v227 = vsel %vm142, %v226, %v202
    %v228 = vsel %vm141, %v34, %v225
    %v229 = vsel %vm141, 0, %v227
    %v230 = vcosq.f32.pop %v228
    %v231 = vsinq.f32.pop %v228
    %vm232 = vweird.f32 %v34
    %v233 = vadd.s32 %v229, 3
    %v234 = vand.u32 %v233, 3
    %vm235 = vcmp.lt.s32.totalorder %v234, 2
    %vm236 = vcmp.eq.s32.totalorder %v234, 0
    %v237 = vxor.u32 %v231, 2147483648
    %v238 = vsel %vm236, %v230, %v237
    %vm239 = vcmp.eq.s32.totalorder %v234, 2
    %v240 = vxor.u32 %v230, 2147483648
    %v241 = vsel %vm239, %v240, %v231
    %v242 = vsel %vm235, %v238, %v241
    %v243 = vsel %vm232, nan, %v242
    %s244 = scalar_lea.vmem [#allocation5], 8
    %245 = vst.msk [vmem:[%s244] sm:$0xff] %vm138, %v243
    // Predicated region
    $region10: #{tpu_custom_call.1} parent=1 // pred_check
      _
    $region11: #{tpu_custom_call.1} parent=1 // pred_check_branch
      %247 = sbr.rel (0) target = $region13
    $region12: #{tpu_custom_call.1} parent=1 // pred_region
      %s249 = ssub.s32 256, 256
      %250 = vsyncadd [#allocation4], %s249
      %s251 = sshll.u32 [#allocation5], 4
      %s252 = int_to_ptr.vmem [resolvable:$true] %s251
      %257 = dma.vmem_to_hbm [thread:$0]  %s252, 256, %s1, [#allocation4], 128, 128, 8
    $region13: #{tpu_custom_call.1} parent=1 // pred_fallthru
      _
    // Predicated region
    $region14: #{tpu_custom_call.1} parent=1 // pred_check
      _
    $region15: #{tpu_custom_call.1} parent=1 // pred_check_branch
      %259 = sbr.rel (0) target = $region17
    $region16: #{tpu_custom_call.1} parent=1 // pred_region
      %260 = dma.done [#allocation4], 256
    $region17: #{tpu_custom_call.1} parent=1 // pred_fallthru
      _
    %261 = vsyncpa [#allocation3], 1
    %262 = vsyncpa [#allocation4], 1

</llo_original>
